<compile_context>
chip_gen: v7x
topology: tpu7x:2x2x1
jax: 0.10.0
libtpu: 0.0.40
codegen_flags: <defaults>
</compile_context>

<pallas_src>
import jax
import jax.numpy as jnp
from jax.experimental import pallas as pl
from jax.experimental.pallas import tpu as pltpu

_TARGET_BLOCK_BYTES = 2 * 1024 * 1024   # ~2 MiB per x/out block


def _scale_kernel(x_ref, k_ref, o_ref):
    # x_ref: (row_blk, col_blk); k_ref: (row_blk, 1) f32 log-scale column.
    # exp runs on the EUP (free slot), the broadcast-mul on the VPU; the
    # binding resource is HBM DMA, so the body stays minimal (no MXU use).
    scale = jnp.exp(k_ref[...])                              # f32 exp
    o_ref[...] = (scale * x_ref[...]).astype(o_ref.dtype)


def _pick_tile(extent, unit, max_tile):
    """Largest tile <= max_tile along one axis.

    Prefers a multiple of `unit` that divides `extent` exactly; returns the
    full `extent` when it already fits; otherwise falls back to the largest
    multiple of `unit` <= max_tile (Pallas masks the ragged edge block).
    """
    if extent <= max_tile:
        return extent
    t = (max_tile // unit) * unit
    cand = t
    while cand >= unit:
        if extent % cand == 0:
            return cand
        cand -= unit
    return max(unit, t)


def _choose_blocks(R, L, itemsize, target_bytes=_TARGET_BLOCK_BYTES):
    """Pick (row_blk, col_blk) so each x/out block is ~target_bytes."""
    # Tiny inputs: a single grid step beats per-step overhead (~0.35 us/step).
    if R * L * itemsize <= target_bytes:
        return R, L
    # Lane axis: keep full H*W if an 8-row stripe fits, else a multiple of 128.
    if 8 * L * itemsize <= target_bytes:
        col_blk = L
    else:
        col_blk = _pick_tile(L, 128, max(128, target_bytes // (8 * itemsize)))
    # Row axis: multiple of 8 sized so row_blk * col_blk ~= target_bytes.
    max_rows = max(8, target_bytes // (col_blk * itemsize))
    row_blk = _pick_tile(R, 8, max_rows)
    return row_blk, col_blk


def _run_scale(x2d, k2d, *, alias_input=False):
    """exp(k2d) * x2d via Pallas.  x2d: (R, L); k2d: (R, 1) f32 log-scale."""
    R, L = x2d.shape
    row_blk, col_blk = _choose_blocks(R, L, x2d.dtype.itemsize)
    grid = (pl.cdiv(R, row_blk), pl.cdiv(L, col_blk))
    return pl.pallas_call(
        _scale_kernel,
        out_shape=jax.ShapeDtypeStruct((R, L), x2d.dtype),
        grid_spec=pltpu.PrefetchScalarGridSpec(
            num_scalar_prefetch=0,
            grid=grid,
            in_specs=[
                pl.BlockSpec((row_blk, col_blk), lambda i, j: (i, j)),
                # log-scale column: block index ignores j -> the same block is
                # reused across the whole lane axis (no per-step narrow DMA).
                pl.BlockSpec((row_blk, 1), lambda i, j: (i, 0)),
            ],
            out_specs=pl.BlockSpec((row_blk, col_blk), lambda i, j: (i, j)),
        ),
        compiler_params=pltpu.CompilerParams(
            # rows are independent -> megacore / v7x dual-TC sharding.
            dimension_semantics=("parallel", "arbitrary")),
        # Optional: reuse x's HBM buffer when the caller no longer needs x.
        input_output_aliases=({0: 0} if alias_input else {}),
    )(x2d, k2d.astype(jnp.float32))


def scale_forward(x, log_kernel):
    """forward(x, inverse=False): returns (exp(kernel) * x, kernel).

    x:          (N, C, H, W)   with N broadcasting against log_kernel.shape[0]
    log_kernel: (K, C, 1, 1)
    """
    N, C, H, W = x.shape
    K = log_kernel.shape[0]
    B = max(N, K)                                    # broadcast over batch dim
    k = jnp.broadcast_to(log_kernel.astype(jnp.float32),
                         (B, C, 1, 1)).reshape(B * C, 1)
    x2 = jnp.broadcast_to(x, (B, C, H, W)).reshape(B * C, H * W)
    out2 = _run_scale(x2, k)
    return out2.reshape(B, C, H, W), log_kernel


def scale_inverse(x, log_kernel):
    """forward(x, inverse=True): returns exp(-kernel[0:1]) * x."""
    N, C, H, W = x.shape
    k0 = (-log_kernel[0:1]).astype(jnp.float32)      # (1, C, 1, 1)
    k = jnp.broadcast_to(k0, (N, C, 1, 1)).reshape(N * C, 1)
    x2 = x.reshape(N * C, H * W)
    return _run_scale(x2, k).reshape(N, C, H, W)


def init_scale_kernel(key, dim=(1, 32, 1, 1), repeat=8):
    """Deterministic xavier_normal init of the (repeat, C, 1, 1) kernel param."""
    shape = (repeat * dim[0], dim[1], dim[2], dim[3])
    # torch xavier_normal_ on a 4-D tensor: fan_in = C*1*1, fan_out = N*1*1
    fan_in = shape[1] * shape[2] * shape[3]
    fan_out = shape[0] * shape[2] * shape[3]
    std = (2.0 / (fan_in + fan_out)) ** 0.5
    return std * jax.random.normal(key, shape, dtype=jnp.float32)


if __name__ == "__main__":
    key = jax.random.PRNGKey(0)
    k_key, x_key = jax.random.split(key)

    # Parameter: (8, 32, 1, 1); x broadcasts against it -> N = 8, C = 32.
    log_kernel = init_scale_kernel(k_key)            # (8, 32, 1, 1)
    N, C, H, W = 8, 32, 16, 16
    x = jax.random.normal(x_key, (N, C, H, W), dtype=jnp.float32)

    # forward / inverse paths (tiny shape -> single-block grid = (1, 1))
    y, k_out = scale_forward(x, log_kernel)
    y = jax.block_until_ready(y)
    y_inv = jax.block_until_ready(scale_inverse(x, log_kernel))

    ref_fwd = jnp.exp(log_kernel) * x
    ref_inv = jnp.exp(-log_kernel[0:1]) * x
    assert y.shape == (N, C, H, W) and k_out.shape == (8, 32, 1, 1)
    assert jnp.allclose(y, ref_fwd, atol=1e-5, rtol=1e-5)
    assert jnp.allclose(y_inv, ref_inv, atol=1e-5, rtol=1e-5)

    # Exercise the row-tiled path (4 MiB array -> grid = (2, 1)).
    x_big = jax.random.normal(jax.random.PRNGKey(1), (N, C, 64, 64), jnp.float32)
    y_big = jax.block_until_ready(scale_inverse(x_big, log_kernel))
    assert jnp.allclose(y_big, jnp.exp(-log_kernel[0:1]) * x_big,
                        atol=1e-5, rtol=1e-5)

    # Exercise the lane-tiled path (wide H*W, few rows -> grid = (1, 2)).
    x_wide = jax.random.normal(jax.random.PRNGKey(2), (8, 131072), jnp.float32)
    k_wide = 0.1 * jax.random.normal(jax.random.PRNGKey(3), (8, 1), jnp.float32)
    y_wide = jax.block_until_ready(_run_scale(x_wide, k_wide))
    assert jnp.allclose(y_wide, jnp.exp(k_wide) * x_wide, atol=1e-5, rtol=1e-5)

    print("KERNEL_OK")
</pallas_src>

<mosaic_0001>
module attributes {stable_mosaic.version = 11 : i64} {
  func.func @_scale_kernel(%arg0: i32, %arg1: i32, %arg2: memref<256x256xf32, #tpu.memory_space<vmem>>, %arg3: memref<256x1xf32, #tpu.memory_space<vmem>>, %arg4: memref<256x256xf32, #tpu.memory_space<vmem>>) attributes {dimension_semantics = [#tpu.dimension_semantics<parallel>, #tpu.dimension_semantics<arbitrary>], iteration_bounds = array<i64: 1, 1>, scalar_prefetch = 0 : i64, scratch_operands = 0 : i64, tpu.core_type = #tpu.core_type<tc>, window_params = [{transform_indices = @transform_0, window_bounds = array<i64: 256, 256>}, {transform_indices = @transform_1, window_bounds = array<i64: 256, 1>}, {transform_indices = @transform_2, window_bounds = array<i64: 256, 256>}]} {
    %c0 = arith.constant 0 : index
    %c0_0 = arith.constant 0 : index
    %0 = vector.load %arg3[%c0, %c0_0] : memref<256x1xf32, #tpu.memory_space<vmem>>, vector<256x1xf32>
    %1 = math.exp %0 : vector<256x1xf32>
    %c0_1 = arith.constant 0 : index
    %c0_2 = arith.constant 0 : index
    %2 = vector.load %arg2[%c0_1, %c0_2] : memref<256x256xf32, #tpu.memory_space<vmem>>, vector<256x256xf32>
    %3 = vector.broadcast %1 : vector<256x1xf32> to vector<256x256xf32>
    %4 = arith.mulf %3, %2 : vector<256x256xf32>
    %c0_3 = arith.constant 0 : index
    %c0_4 = arith.constant 0 : index
    %5 = vector.load %arg4[%c0_3, %c0_4] : memref<256x256xf32, #tpu.memory_space<vmem>>, vector<256x256xf32>
    tpu.vector_store %arg4[%c0_3, %c0_4], %4 {strides = array<i32>} : memref<256x256xf32, #tpu.memory_space<vmem>>, vector<256x256xf32>,
    return
  }
  func.func @transform_0(%arg0: i32, %arg1: i32) -> (i32, i32) {
    %c0_i32 = arith.constant 0 : i32
    return %arg0, %arg1 : i32, i32
  }
  func.func @transform_1(%arg0: i32, %arg1: i32) -> (i32, i32) {
    %c0_i32 = arith.constant 0 : i32
    %c0_i32_0 = arith.constant 0 : i32
    return %arg0, %c0_i32 : i32, i32
  }
  func.func @transform_2(%arg0: i32, %arg1: i32) -> (i32, i32) {
    %c0_i32 = arith.constant 0 : i32
    return %arg0, %arg1 : i32, i32
  }
}

</mosaic_0001>

<llo_original>
// kernel: tpu_custom_call.1
$region0: #{tpu_custom_call.1}
  #allocation0 [shape = 'u32[]', space=smem, size = 0x4, offset = 0x4, fixed_abs, tag = 'smem constant byte address 0x4 - core index']
  #allocation1 [shape = 'u32[144,128]{1,0:T(1,128)}', space=vmem, size = 0x12000, scoped, tag = 'internal scratch']
  %s0 = inlined_call_operand.hbm [shape: f32[256,256], index: 0, kind: input, shape index: {}]
  %s1 = inlined_call_operand.vmem [shape: f32[256,1], index: 1, kind: input, shape index: {}]
  %s2 = inlined_call_operand.hbm [shape: f32[256,256], index: 2, kind: output, shape index: {}]
  %s3 = sld [smem:[#allocation0]]
  $region22: #{tpu_custom_call.1} parent=0
    _
  %s5 = ssub.s32 1, %s3
  %s6 = scalar_select 0, %s5, %s3
  $region1: #{tpu_custom_call.1} parent=0
    #allocation2 [shape = 'u8[262144]{0}', space=vmem, size = 0x40000, scoped, tag = 'input window, operand 0, single buffered']
    #allocation3 [shape = 's32[1]{0}', space=sflag, size = 0x4, scoped, tag = 'scoped memory for tpu_custom_call.1']
    #allocation4 [shape = 's32[1]{0}', space=sflag, size = 0x4, scoped, tag = 'scoped memory for tpu_custom_call.1']
    #allocation5 [shape = 'u8[262144]{0}', space=vmem, size = 0x40000, scoped, tag = 'output window, operand 0, single buffered']
    %7 = vsyncpa [#allocation3], 0
    %8 = vsyncpa [#allocation4], 0
    // Predicated region
    $region2: #{tpu_custom_call.1} parent=1 // pred_check
      _
    $region3: #{tpu_custom_call.1} parent=1 // pred_check_branch
      %10 = sbr.rel (0) target = $region5
    $region4: #{tpu_custom_call.1} parent=1 // pred_region
      %s12 = ssub.s32 8192, 8192
      %13 = vsyncadd [#allocation3], %s12
      %s14 = sshll.u32 [#allocation2], 4
      %s15 = int_to_ptr.vmem [resolvable:$true] %s14
      %20 = dma.hbm_to_vmem [thread:$0]  %s0, 8192, %s15, [#allocation3], 256, 256, 16
    $region5: #{tpu_custom_call.1} parent=1 // pred_fallthru
      _
    // Predicated region
    $region6: #{tpu_custom_call.1} parent=1 // pred_check
      _
    $region7: #{tpu_custom_call.1} parent=1 // pred_check_branch
      %22 = sbr.rel (0) target = $region9
    $region8: #{tpu_custom_call.1} parent=1 // pred_region
      _
    $region9: #{tpu_custom_call.1} parent=1 // pred_fallthru
      _
    // Predicated region
    $region10: #{tpu_custom_call.1} parent=1 // pred_check
      _
    $region11: #{tpu_custom_call.1} parent=1 // pred_check_branch
      %24 = sbr.rel (0) target = $region13
    $region12: #{tpu_custom_call.1} parent=1 // pred_region
      %25 = dma.done [#allocation3], 8192
    $region13: #{tpu_custom_call.1} parent=1 // pred_fallthru
      _
    %v26 = vld [vmem:[%s1] sm:$0xff]
    %v27 = vld [vmem:[%s1 + $0x8] sm:$0xff]
    %v28 = vld [vmem:[%s1 + $0x10] sm:$0xff]
    %v29 = vld [vmem:[%s1 + $0x18] sm:$0xff]
    %v30 = vld [vmem:[%s1 + $0x20] sm:$0xff]
    %v31 = vld [vmem:[%s1 + $0x28] sm:$0xff]
    %v32 = vld [vmem:[%s1 + $0x30] sm:$0xff]
    %v33 = vld [vmem:[%s1 + $0x38] sm:$0xff]
    %v34 = vld [vmem:[%s1 + $0x40] sm:$0xff]
    %v35 = vld [vmem:[%s1 + $0x48] sm:$0xff]
    %v36 = vld [vmem:[%s1 + $0x50] sm:$0xff]
    %v37 = vld [vmem:[%s1 + $0x58] sm:$0xff]
    %v38 = vld [vmem:[%s1 + $0x60] sm:$0xff]
    %v39 = vld [vmem:[%s1 + $0x68] sm:$0xff]
    %v40 = vld [vmem:[%s1 + $0x70] sm:$0xff]
    %v41 = vld [vmem:[%s1 + $0x78] sm:$0xff]
    %v42 = vld [vmem:[%s1 + $0x80] sm:$0xff]
    %v43 = vld [vmem:[%s1 + $0x88] sm:$0xff]
    %v44 = vld [vmem:[%s1 + $0x90] sm:$0xff]
    %v45 = vld [vmem:[%s1 + $0x98] sm:$0xff]
    %v46 = vld [vmem:[%s1 + $0xa0] sm:$0xff]
    %v47 = vld [vmem:[%s1 + $0xa8] sm:$0xff]
    %v48 = vld [vmem:[%s1 + $0xb0] sm:$0xff]
    %v49 = vld [vmem:[%s1 + $0xb8] sm:$0xff]
    %v50 = vld [vmem:[%s1 + $0xc0] sm:$0xff]
    %v51 = vld [vmem:[%s1 + $0xc8] sm:$0xff]
    %v52 = vld [vmem:[%s1 + $0xd0] sm:$0xff]
    %v53 = vld [vmem:[%s1 + $0xd8] sm:$0xff]
    %v54 = vld [vmem:[%s1 + $0xe0] sm:$0xff]
    %v55 = vld [vmem:[%s1 + $0xe8] sm:$0xff]
    %v56 = vld [vmem:[%s1 + $0xf0] sm:$0xff]
    %v57 = vld [vmem:[%s1 + $0xf8] sm:$0xff]
    %v58 = vmul.f32 %v26, 1.442695
    %v59 = vpow.pop %v58
    %v60 = vmul.f32 %v27, 1.442695
    %v61 = vpow.pop %v60
    %v62 = vmul.f32 %v28, 1.442695
    %v63 = vpow.pop %v62
    %v64 = vmul.f32 %v29, 1.442695
    %v65 = vpow.pop %v64
    %v66 = vmul.f32 %v30, 1.442695
    %v67 = vpow.pop %v66
    %v68 = vmul.f32 %v31, 1.442695
    %v69 = vpow.pop %v68
    %v70 = vmul.f32 %v32, 1.442695
    %v71 = vpow.pop %v70
    %v72 = vmul.f32 %v33, 1.442695
    %v73 = vpow.pop %v72
    %v74 = vmul.f32 %v34, 1.442695
    %v75 = vpow.pop %v74
    %v76 = vmul.f32 %v35, 1.442695
    %v77 = vpow.pop %v76
    %v78 = vmul.f32 %v36, 1.442695
    %v79 = vpow.pop %v78
    %v80 = vmul.f32 %v37, 1.442695
    %v81 = vpow.pop %v80
    %v82 = vmul.f32 %v38, 1.442695
    %v83 = vpow.pop %v82
    %v84 = vmul.f32 %v39, 1.442695
    %v85 = vpow.pop %v84
    %v86 = vmul.f32 %v40, 1.442695
    %v87 = vpow.pop %v86
    %v88 = vmul.f32 %v41, 1.442695
    %v89 = vpow.pop %v88
    %v90 = vmul.f32 %v42, 1.442695
    %v91 = vpow.pop %v90
    %v92 = vmul.f32 %v43, 1.442695
    %v93 = vpow.pop %v92
    %v94 = vmul.f32 %v44, 1.442695
    %v95 = vpow.pop %v94
    %v96 = vmul.f32 %v45, 1.442695
    %v97 = vpow.pop %v96
    %v98 = vmul.f32 %v46, 1.442695
    %v99 = vpow.pop %v98
    %v100 = vmul.f32 %v47, 1.442695
    %v101 = vpow.pop %v100
    %v102 = vmul.f32 %v48, 1.442695
    %v103 = vpow.pop %v102
    %v104 = vmul.f32 %v49, 1.442695
    %v105 = vpow.pop %v104
    %v106 = vmul.f32 %v50, 1.442695
    %v107 = vpow.pop %v106
    %v108 = vmul.f32 %v51, 1.442695
    %v109 = vpow.pop %v108
    %v110 = vmul.f32 %v52, 1.442695
    %v111 = vpow.pop %v110
    %v112 = vmul.f32 %v53, 1.442695
    %v113 = vpow.pop %v112
    %v114 = vmul.f32 %v54, 1.442695
    %v115 = vpow.pop %v114
    %v116 = vmul.f32 %v55, 1.442695
    %v117 = vpow.pop %v116
    %v118 = vmul.f32 %v56, 1.442695
    %v119 = vpow.pop %v118
    %v120 = vmul.f32 %v57, 1.442695
    %v121 = vpow.pop %v120
    %v122 = vld [vmem:[#allocation2] sm:$0xff]
    %v123 = vld [vmem:[#allocation2 + $0x8] sm:$0xff]
    %v124 = vld [vmem:[#allocation2 + $0x10] sm:$0xff]
    %v125 = vld [vmem:[#allocation2 + $0x18] sm:$0xff]
    %v126 = vld [vmem:[#allocation2 + $0x20] sm:$0xff]
    %v127 = vld [vmem:[#allocation2 + $0x28] sm:$0xff]
    %v128 = vld [vmem:[#allocation2 + $0x30] sm:$0xff]
    %v129 = vld [vmem:[#allocation2 + $0x38] sm:$0xff]
    %v130 = vld [vmem:[#allocation2 + $0x40] sm:$0xff]
    %v131 = vld [vmem:[#allocation2 + $0x48] sm:$0xff]
    %v132 = vld [vmem:[#allocation2 + $0x50] sm:$0xff]
    %v133 = vld [vmem:[#allocation2 + $0x58] sm:$0xff]
    %v134 = vld [vmem:[#allocation2 + $0x60] sm:$0xff]
    %v135 = vld [vmem:[#allocation2 + $0x68] sm:$0xff]
    %v136 = vld [vmem:[#allocation2 + $0x70] sm:$0xff]
    %v137 = vld [vmem:[#allocation2 + $0x78] sm:$0xff]
    %v138 = vld [vmem:[#allocation2 + $0x80] sm:$0xff]
    %v139 = vld [vmem:[#allocation2 + $0x88] sm:$0xff]
    %v140 = vld [vmem:[#allocation2 + $0x90] sm:$0xff]
    %v141 = vld [vmem:[#allocation2 + $0x98] sm:$0xff]
    %v142 = vld [vmem:[#allocation2 + $0xa0] sm:$0xff]
    %v143 = vld [vmem:[#allocation2 + $0xa8] sm:$0xff]
    %v144 = vld [vmem:[#allocation2 + $0xb0] sm:$0xff]
    %v145 = vld [vmem:[#allocation2 + $0xb8] sm:$0xff]
    %v146 = vld [vmem:[#allocation2 + $0xc0] sm:$0xff]
    %v147 = vld [vmem:[#allocation2 + $0xc8] sm:$0xff]
    %v148 = vld [vmem:[#allocation2 + $0xd0] sm:$0xff]
    %v149 = vld [vmem:[#allocation2 + $0xd8] sm:$0xff]
    %v150 = vld [vmem:[#allocation2 + $0xe0] sm:$0xff]
    %v151 = vld [vmem:[#allocation2 + $0xe8] sm:$0xff]
    %v152 = vld [vmem:[#allocation2 + $0xf0] sm:$0xff]
    %v153 = vld [vmem:[#allocation2 + $0xf8] sm:$0xff]
    %v154 = vld [vmem:[#allocation2 + $0x100] sm:$0xff]
    %v155 = vld [vmem:[#allocation2 + $0x108] sm:$0xff]
    %v156 = vld [vmem:[#allocation2 + $0x110] sm:$0xff]
    %v157 = vld [vmem:[#allocation2 + $0x118] sm:$0xff]
    %v158 = vld [vmem:[#allocation2 + $0x120] sm:$0xff]
    %v159 = vld [vmem:[#allocation2 + $0x128] sm:$0xff]
    %v160 = vld [vmem:[#allocation2 + $0x130] sm:$0xff]
    %v161 = vld [vmem:[#allocation2 + $0x138] sm:$0xff]
    %v162 = vld [vmem:[#allocation2 + $0x140] sm:$0xff]
    %v163 = vld [vmem:[#allocation2 + $0x148] sm:$0xff]
    %v164 = vld [vmem:[#allocation2 + $0x150] sm:$0xff]
    %v165 = vld [vmem:[#allocation2 + $0x158] sm:$0xff]
    %v166 = vld [vmem:[#allocation2 + $0x160] sm:$0xff]
    %v167 = vld [vmem:[#allocation2 + $0x168] sm:$0xff]
    %v168 = vld [vmem:[#allocation2 + $0x170] sm:$0xff]
    %v169 = vld [vmem:[#allocation2 + $0x178] sm:$0xff]
    %v170 = vld [vmem:[#allocation2 + $0x180] sm:$0xff]
    %v171 = vld [vmem:[#allocation2 + $0x188] sm:$0xff]
    %v172 = vld [vmem:[#allocation2 + $0x190] sm:$0xff]
    %v173 = vld [vmem:[#allocation2 + $0x198] sm:$0xff]
    %v174 = vld [vmem:[#allocation2 + $0x1a0] sm:$0xff]
    %v175 = vld [vmem:[#allocation2 + $0x1a8] sm:$0xff]
    %v176 = vld [vmem:[#allocation2 + $0x1b0] sm:$0xff]
    %v177 = vld [vmem:[#allocation2 + $0x1b8] sm:$0xff]
    %v178 = vld [vmem:[#allocation2 + $0x1c0] sm:$0xff]
    %v179 = vld [vmem:[#allocation2 + $0x1c8] sm:$0xff]
    %v180 = vld [vmem:[#allocation2 + $0x1d0] sm:$0xff]
    %v181 = vld [vmem:[#allocation2 + $0x1d8] sm:$0xff]
    %v182 = vld [vmem:[#allocation2 + $0x1e0] sm:$0xff]
    %v183 = vld [vmem:[#allocation2 + $0x1e8] sm:$0xff]
    %v184 = vld [vmem:[#allocation2 + $0x1f0] sm:$0xff]
    %v185 = vld [vmem:[#allocation2 + $0x1f8] sm:$0xff]
    %187 = vset.pattern.permute.xlu0 0
    %188 = vperm.xlu0 %187, %v59
    %v189 = vpop.permute.xlu0 %188
    %192 = vset.pattern.permute.xlu0 0
    %193 = vperm.xlu0 %192, %v61
    %v194 = vpop.permute.xlu0 %193
    %197 = vset.pattern.permute.xlu0 0
    %198 = vperm.xlu0 %197, %v63
    %v199 = vpop.permute.xlu0 %198
    %202 = vset.pattern.permute.xlu0 0
    %203 = vperm.xlu0 %202, %v65
    %v204 = vpop.permute.xlu0 %203
    %207 = vset.pattern.permute.xlu0 0
    %208 = vperm.xlu0 %207, %v67
    %v209 = vpop.permute.xlu0 %208
    %212 = vset.pattern.permute.xlu0 0
    %213 = vperm.xlu0 %212, %v69
    %v214 = vpop.permute.xlu0 %213
    %217 = vset.pattern.permute.xlu0 0
    %218 = vperm.xlu0 %217, %v71
    %v219 = vpop.permute.xlu0 %218
    %222 = vset.pattern.permute.xlu0 0
    %223 = vperm.xlu0 %222, %v73
    %v224 = vpop.permute.xlu0 %223
    %227 = vset.pattern.permute.xlu0 0
    %228 = vperm.xlu0 %227, %v75
    %v229 = vpop.permute.xlu0 %228
    %232 = vset.pattern.permute.xlu0 0
    %233 = vperm.xlu0 %232, %v77
    %v234 = vpop.permute.xlu0 %233
    %237 = vset.pattern.permute.xlu0 0
    %238 = vperm.xlu0 %237, %v79
    %v239 = vpop.permute.xlu0 %238
    %242 = vset.pattern.permute.xlu0 0
    %243 = vperm.xlu0 %242, %v81
    %v244 = vpop.permute.xlu0 %243
    %247 = vset.pattern.permute.xlu0 0
    %248 = vperm.xlu0 %247, %v83
    %v249 = vpop.permute.xlu0 %248
    %252 = vset.pattern.permute.xlu0 0
    %253 = vperm.xlu0 %252, %v85
    %v254 = vpop.permute.xlu0 %253
    %257 = vset.pattern.permute.xlu0 0
    %258 = vperm.xlu0 %257, %v87
    %v259 = vpop.permute.xlu0 %258
    %262 = vset.pattern.permute.xlu0 0
    %263 = vperm.xlu0 %262, %v89
    %v264 = vpop.permute.xlu0 %263
    %267 = vset.pattern.permute.xlu0 0
    %268 = vperm.xlu0 %267, %v91
    %v269 = vpop.permute.xlu0 %268
    %272 = vset.pattern.permute.xlu0 0
    %273 = vperm.xlu0 %272, %v93
    %v274 = vpop.permute.xlu0 %273
    %277 = vset.pattern.permute.xlu0 0
    %278 = vperm.xlu0 %277, %v95
    %v279 = vpop.permute.xlu0 %278
    %282 = vset.pattern.permute.xlu0 0
    %283 = vperm.xlu0 %282, %v97
    %v284 = vpop.permute.xlu0 %283
    %287 = vset.pattern.permute.xlu0 0
    %288 = vperm.xlu0 %287, %v99
    %v289 = vpop.permute.xlu0 %288
    %292 = vset.pattern.permute.xlu0 0
    %293 = vperm.xlu0 %292, %v101
    %v294 = vpop.permute.xlu0 %293
    %297 = vset.pattern.permute.xlu0 0
    %298 = vperm.xlu0 %297, %v103
    %v299 = vpop.permute.xlu0 %298
    %302 = vset.pattern.permute.xlu0 0
    %303 = vperm.xlu0 %302, %v105
    %v304 = vpop.permute.xlu0 %303
    %307 = vset.pattern.permute.xlu0 0
    %308 = vperm.xlu0 %307, %v107
    %v309 = vpop.permute.xlu0 %308
    %312 = vset.pattern.permute.xlu0 0
    %313 = vperm.xlu0 %312, %v109
    %v314 = vpop.permute.xlu0 %313
    %317 = vset.pattern.permute.xlu0 0
    %318 = vperm.xlu0 %317, %v111
    %v319 = vpop.permute.xlu0 %318
    %322 = vset.pattern.permute.xlu0 0
    %323 = vperm.xlu0 %322, %v113
    %v324 = vpop.permute.xlu0 %323
    %327 = vset.pattern.permute.xlu0 0
    %328 = vperm.xlu0 %327, %v115
    %v329 = vpop.permute.xlu0 %328
    %332 = vset.pattern.permute.xlu0 0
    %333 = vperm.xlu0 %332, %v117
    %v334 = vpop.permute.xlu0 %333
    %337 = vset.pattern.permute.xlu0 0
    %338 = vperm.xlu0 %337, %v119
    %v339 = vpop.permute.xlu0 %338
    %342 = vset.pattern.permute.xlu0 0
    %343 = vperm.xlu0 %342, %v121
    %v344 = vpop.permute.xlu0 %343
    %v346 = vmul.f32 %v189, %v122
    %v347 = vmul.f32 %v189, %v123
    %v348 = vmul.f32 %v194, %v124
    %v349 = vmul.f32 %v194, %v125
    %v350 = vmul.f32 %v199, %v126
    %v351 = vmul.f32 %v199, %v127
    %v352 = vmul.f32 %v204, %v128
    %v353 = vmul.f32 %v204, %v129
    %v354 = vmul.f32 %v209, %v130
    %v355 = vmul.f32 %v209, %v131
    %v356 = vmul.f32 %v214, %v132
    %v357 = vmul.f32 %v214, %v133
    %v358 = vmul.f32 %v219, %v134
    %v359 = vmul.f32 %v219, %v135
    %v360 = vmul.f32 %v224, %v136
    %v361 = vmul.f32 %v224, %v137
    %v362 = vmul.f32 %v229, %v138
    %v363 = vmul.f32 %v229, %v139
    %v364 = vmul.f32 %v234, %v140
    %v365 = vmul.f32 %v234, %v141
    %v366 = vmul.f32 %v239, %v142
    %v367 = vmul.f32 %v239, %v143
    %v368 = vmul.f32 %v244, %v144
    %v369 = vmul.f32 %v244, %v145
    %v370 = vmul.f32 %v249, %v146
    %v371 = vmul.f32 %v249, %v147
    %v372 = vmul.f32 %v254, %v148
    %v373 = vmul.f32 %v254, %v149
    %v374 = vmul.f32 %v259, %v150
    %v375 = vmul.f32 %v259, %v151
    %v376 = vmul.f32 %v264, %v152
    %v377 = vmul.f32 %v264, %v153
    %v378 = vmul.f32 %v269, %v154
    %v379 = vmul.f32 %v269, %v155
    %v380 = vmul.f32 %v274, %v156
    %v381 = vmul.f32 %v274, %v157
    %v382 = vmul.f32 %v279, %v158
    %v383 = vmul.f32 %v279, %v159
    %v384 = vmul.f32 %v284, %v160
    %v385 = vmul.f32 %v284, %v161
    %v386 = vmul.f32 %v289, %v162
    %v387 = vmul.f32 %v289, %v163
    %v388 = vmul.f32 %v294, %v164
    %v389 = vmul.f32 %v294, %v165
    %v390 = vmul.f32 %v299, %v166
    %v391 = vmul.f32 %v299, %v167
    %v392 = vmul.f32 %v304, %v168
    %v393 = vmul.f32 %v304, %v169
    %v394 = vmul.f32 %v309, %v170
    %v395 = vmul.f32 %v309, %v171
    %v396 = vmul.f32 %v314, %v172
    %v397 = vmul.f32 %v314, %v173
    %v398 = vmul.f32 %v319, %v174
    %v399 = vmul.f32 %v319, %v175
    %v400 = vmul.f32 %v324, %v176
    %v401 = vmul.f32 %v324, %v177
    %v402 = vmul.f32 %v329, %v178
    %v403 = vmul.f32 %v329, %v179
    %v404 = vmul.f32 %v334, %v180
    %v405 = vmul.f32 %v334, %v181
    %v406 = vmul.f32 %v339, %v182
    %v407 = vmul.f32 %v339, %v183
    %v408 = vmul.f32 %v344, %v184
    %v409 = vmul.f32 %v344, %v185
    %410 = vst [vmem:[#allocation5] sm:$0xff] %v346
    %411 = vst [vmem:[#allocation5 + $0x8] sm:$0xff] %v347
    %412 = vst [vmem:[#allocation5 + $0x10] sm:$0xff] %v348
    %413 = vst [vmem:[#allocation5 + $0x18] sm:$0xff] %v349
    %414 = vst [vmem:[#allocation5 + $0x20] sm:$0xff] %v350
    %415 = vst [vmem:[#allocation5 + $0x28] sm:$0xff] %v351
    %416 = vst [vmem:[#allocation5 + $0x30] sm:$0xff] %v352
    %417 = vst [vmem:[#allocation5 + $0x38] sm:$0xff] %v353
    %418 = vst [vmem:[#allocation5 + $0x40] sm:$0xff] %v354
    %419 = vst [vmem:[#allocation5 + $0x48] sm:$0xff] %v355
    %420 = vst [vmem:[#allocation5 + $0x50] sm:$0xff] %v356
    %421 = vst [vmem:[#allocation5 + $0x58] sm:$0xff] %v357
    %422 = vst [vmem:[#allocation5 + $0x60] sm:$0xff] %v358
    %423 = vst [vmem:[#allocation5 + $0x68] sm:$0xff] %v359
    %424 = vst [vmem:[#allocation5 + $0x70] sm:$0xff] %v360
    %425 = vst [vmem:[#allocation5 + $0x78] sm:$0xff] %v361
    %426 = vst [vmem:[#allocation5 + $0x80] sm:$0xff] %v362
    %427 = vst [vmem:[#allocation5 + $0x88] sm:$0xff] %v363
    %428 = vst [vmem:[#allocation5 + $0x90] sm:$0xff] %v364
    %429 = vst [vmem:[#allocation5 + $0x98] sm:$0xff] %v365
    %430 = vst [vmem:[#allocation5 + $0xa0] sm:$0xff] %v366
    %431 = vst [vmem:[#allocation5 + $0xa8] sm:$0xff] %v367
    %432 = vst [vmem:[#allocation5 + $0xb0] sm:$0xff] %v368
    %433 = vst [vmem:[#allocation5 + $0xb8] sm:$0xff] %v369
    %434 = vst [vmem:[#allocation5 + $0xc0] sm:$0xff] %v370
    %435 = vst [vmem:[#allocation5 + $0xc8] sm:$0xff] %v371
    %436 = vst [vmem:[#allocation5 + $0xd0] sm:$0xff] %v372
    %437 = vst [vmem:[#allocation5 + $0xd8] sm:$0xff] %v373
    %438 = vst [vmem:[#allocation5 + $0xe0] sm:$0xff] %v374
    %439 = vst [vmem:[#allocation5 + $0xe8] sm:$0xff] %v375
    %440 = vst [vmem:[#allocation5 + $0xf0] sm:$0xff] %v376
    %441 = vst [vmem:[#allocation5 + $0xf8] sm:$0xff] %v377
    %442 = vst [vmem:[#allocation5 + $0x100] sm:$0xff] %v378
    %443 = vst [vmem:[#allocation5 + $0x108] sm:$0xff] %v379
    %444 = vst [vmem:[#allocation5 + $0x110] sm:$0xff] %v380
    %445 = vst [vmem:[#allocation5 + $0x118] sm:$0xff] %v381
    %446 = vst [vmem:[#allocation5 + $0x120] sm:$0xff] %v382
    %447 = vst [vmem:[#allocation5 + $0x128] sm:$0xff] %v383
    %448 = vst [vmem:[#allocation5 + $0x130] sm:$0xff] %v384
    %449 = vst [vmem:[#allocation5 + $0x138] sm:$0xff] %v385
    %450 = vst [vmem:[#allocation5 + $0x140] sm:$0xff] %v386
    %451 = vst [vmem:[#allocation5 + $0x148] sm:$0xff] %v387
    %452 = vst [vmem:[#allocation5 + $0x150] sm:$0xff] %v388
    %453 = vst [vmem:[#allocation5 + $0x158] sm:$0xff] %v389
    %454 = vst [vmem:[#allocation5 + $0x160] sm:$0xff] %v390
    %455 = vst [vmem:[#allocation5 + $0x168] sm:$0xff] %v391
    %456 = vst [vmem:[#allocation5 + $0x170] sm:$0xff] %v392
    %457 = vst [vmem:[#allocation5 + $0x178] sm:$0xff] %v393
    %458 = vst [vmem:[#allocation5 + $0x180] sm:$0xff] %v394
    %459 = vst [vmem:[#allocation5 + $0x188] sm:$0xff] %v395
    %460 = vst [vmem:[#allocation5 + $0x190] sm:$0xff] %v396
    %461 = vst [vmem:[#allocation5 + $0x198] sm:$0xff] %v397
    %462 = vst [vmem:[#allocation5 + $0x1a0] sm:$0xff] %v398
    %463 = vst [vmem:[#allocation5 + $0x1a8] sm:$0xff] %v399
    %464 = vst [vmem:[#allocation5 + $0x1b0] sm:$0xff] %v400
    %465 = vst [vmem:[#allocation5 + $0x1b8] sm:$0xff] %v401
    %466 = vst [vmem:[#allocation5 + $0x1c0] sm:$0xff] %v402
    %467 = vst [vmem:[#allocation5 + $0x1c8] sm:$0xff] %v403
    %468 = vst [vmem:[#allocation5 + $0x1d0] sm:$0xff] %v404
    %469 = vst [vmem:[#allocation5 + $0x1d8] sm:$0xff] %v405
    %470 = vst [vmem:[#allocation5 + $0x1e0] sm:$0xff] %v406
    %471 = vst [vmem:[#allocation5 + $0x1e8] sm:$0xff] %v407
    %472 = vst [vmem:[#allocation5 + $0x1f0] sm:$0xff] %v408
    %473 = vst [vmem:[#allocation5 + $0x1f8] sm:$0xff] %v409
    // Predicated region
    $region14: #{tpu_custom_call.1} parent=1 // pred_check
      _
    $region15: #{tpu_custom_call.1} parent=1 // pred_check_branch
      %475 = sbr.rel (0) target = $region17
    $region16: #{tpu_custom_call.1} parent=1 // pred_region
      %s477 = ssub.s32 8192, 8192
      %478 = vsyncadd [#allocation4], %s477
      %s479 = sshll.u32 [#allocation5], 4
      %s480 = int_to_ptr.vmem [resolvable:$true] %s479
      %485 = dma.vmem_to_hbm [thread:$0]  %s480, 8192, %s2, [#allocation4], 256, 256, 16
    $region17: #{tpu_custom_call.1} parent=1 // pred_fallthru
      _
    // Predicated region
    $region18: #{tpu_custom_call.1} parent=1 // pred_check
      _
    $region19: #{tpu_custom_call.1} parent=1 // pred_check_branch
      %487 = sbr.rel (0) target = $region21
    $region20: #{tpu_custom_call.1} parent=1 // pred_region
      %488 = dma.done [#allocation4], 8192
    $region21: #{tpu_custom_call.1} parent=1 // pred_fallthru
      _
    %489 = vsyncpa [#allocation3], 1
    %490 = vsyncpa [#allocation4], 1

</llo_original>
